<compile_context>
chip_gen: v6e
topology: v6e:2x2x1
jax: 0.10.0
libtpu: 0.0.40
codegen_flags: <defaults>
</compile_context>

<pallas_src>
import jax
import jax.numpy as jnp
from jax.experimental import pallas as pl
from jax.experimental.pallas import tpu as pltpu


_VMEM_LIMIT_BYTES = 32 * 1024 * 1024     # <= physical VMEM on v5e/v6e (128M) and v7x (64M)
_FUSED_BLOCK_LIMIT = 6 * 1024 * 1024     # per (1, C, HW) block; x4 (double-buffered in+out)


def _fold_params(w1, b1, w3, b3, w5, b5):
    """Collapse the three Conv1d's to their center taps (exact for a length-1
    padded sequence).  Pre-transpose the weight and fold the 2x into the bias so
    the kernel does a plain pooled @ wT + b with no in-kernel transpose."""
    w_eff = w1[:, :, 0] + w3[:, :, 1] + w5[:, :, 2]                  # (O, I)
    wt = jnp.asarray(w_eff.T, jnp.float32)                           # (I, O)
    b_eff = (2.0 * (b1 + b3 + b5)).reshape(1, -1).astype(jnp.float32)  # (1, O)
    return wt, b_eff


def _pca_fused_kernel(x_ref, wt_ref, b_ref, o_ref):
    # x_ref : (1, C, HW)  -- one batch image per grid step (lane-dense HW)
    # wt_ref: (C, C)       -- pre-transposed effective weight (resident)
    # b_ref : (1, C)       -- 2 * effective bias (resident)
    x = x_ref[...]
    xf = x.astype(jnp.float32)                         # f32 accumulation (v5e has no bf16 VALU)
    inv_hw = 1.0 / x.shape[-1]
    pooled = jnp.sum(xf, axis=-1) * inv_hw + jnp.max(xf, axis=-1)   # (1, C) = avg + max
    att = jnp.dot(pooled, wt_ref[...],
                  preferred_element_type=jnp.float32) + b_ref[...]  # (1, C)
    o_ref[...] = (xf * att[:, :, None]).astype(o_ref.dtype)


def pca_forward(x, w1, b1, w3, b3, w5, b5, *,
                hw_tile=None, force_two_phase=False, donate_input=False):
    """x: (B, C, H, W). w_k: (C, C, k), b_k: (C,). Returns (B, C, H, W)."""
    B, C, H, W = x.shape
    HW = H * W
    xr = x.reshape(B, C, HW)
    wt, b_eff = _fold_params(w1, b1, w3, b3, w5, b5)
    io_alias = {0: 0} if donate_input else {}   # reuse x's HBM buffer if caller donates it

    block_bytes = C * HW * x.dtype.itemsize
    use_fused = (not force_two_phase) and (block_bytes <= _FUSED_BLOCK_LIMIT)

    if use_fused:
        # ---- single-pass, batch-pipelined path: grid=(B,), one image per step.
        out = pl.pallas_call(
            _pca_fused_kernel,
            out_shape=jax.ShapeDtypeStruct((B, C, HW), x.dtype),
            grid_spec=pltpu.PrefetchScalarGridSpec(
                num_scalar_prefetch=0,
                grid=(B,),
                in_specs=[
                    pl.BlockSpec((1, C, HW), lambda b: (b, 0, 0)),
                    pl.BlockSpec((C, C), lambda b: (0, 0)),
                    pl.BlockSpec((1, C), lambda b: (0, 0)),
                ],
                out_specs=pl.BlockSpec((1, C, HW), lambda b: (b, 0, 0)),
            ),
            compiler_params=pltpu.CompilerParams(
                dimension_semantics=("parallel",),          # megacore sharding on v7x
                vmem_limit_bytes=_VMEM_LIMIT_BYTES,
            ),
            input_output_aliases=io_alias,
        )(xr, wt, b_eff)
        return out.reshape(B, C, H, W)

    # ---- two-phase HW-tiled path: grid = (B, phase, HW tiles) ----------------
    if hw_tile is None:
        hw_tile = min(2048, 128 * pl.cdiv(HW, 128))
    assert hw_tile > 0 and hw_tile % 128 == 0, "hw_tile must be a multiple of 128"
    n_hw = pl.cdiv(HW, hw_tile)
    inv_hw = 1.0 / HW

    def _two_phase_kernel(x_ref, wt_ref, b_ref, o_ref, sum_sc, max_sc, att_sc):
        p = pl.program_id(1)                 # 0 = reduce, 1 = rescale
        h = pl.program_id(2)                 # spatial tile index
        last = pl.num_programs(2) - 1

        @pl.when(p == 0)
        def _phase_reduce():
            xf = x_ref[...].astype(jnp.float32)                       # (1, C, hw_tile)
            # Mask padded lanes of a partial last tile: 0 for the sum, -inf for the max.
            lane = jax.lax.broadcasted_iota(jnp.int32, xf.shape, 2)
            valid = (h * hw_tile + lane) < HW
            tile_sum = jnp.sum(jnp.where(valid, xf, 0.0), axis=-1)    # (1, C)
            tile_max = jnp.max(jnp.where(valid, xf, -jnp.inf), axis=-1)

            @pl.when(h == 0)
            def _init():
                sum_sc[...] = tile_sum
                max_sc[...] = tile_max

            @pl.when(h != 0)
            def _accumulate():
                sum_sc[...] = sum_sc[...] + tile_sum
                max_sc[...] = jnp.maximum(max_sc[...], tile_max)

            @pl.when(h == last)
            def _finalize():
                # Channel-mixing matmul executed once per batch image, not per HW tile.
                pooled = sum_sc[...] * inv_hw + max_sc[...]           # avg + max, (1, C)
                att_sc[...] = (jnp.dot(pooled, wt_ref[...],
                                       preferred_element_type=jnp.float32)
                               + b_ref[...])

        @pl.when(p == 1)
        def _phase_rescale():
            xf = x_ref[...].astype(jnp.float32)
            o_ref[...] = (xf * att_sc[...][:, :, None]).astype(o_ref.dtype)

    out = pl.pallas_call(
        _two_phase_kernel,
        out_shape=jax.ShapeDtypeStruct((B, C, HW), x.dtype),
        grid_spec=pltpu.PrefetchScalarGridSpec(
            num_scalar_prefetch=0,
            grid=(B, 2, n_hw),
            in_specs=[
                pl.BlockSpec((1, C, hw_tile), lambda b, p, h: (b, 0, h)),
                pl.BlockSpec((C, C), lambda b, p, h: (0, 0)),
                pl.BlockSpec((1, C), lambda b, p, h: (0, 0)),
            ],
            # During phase 0 the output index is pinned to (b, 0, 0), so the
            # (unwritten) resident output block is never flushed; phase 1 writes
            # block (b, 0, h) before each flush.
            out_specs=pl.BlockSpec((1, C, hw_tile), lambda b, p, h: (b, 0, h * p)),
            scratch_shapes=[pltpu.VMEM((1, C), jnp.float32)] * 3,   # sum, max, att
        ),
        compiler_params=pltpu.CompilerParams(
            dimension_semantics=("parallel", "arbitrary", "arbitrary"),
            vmem_limit_bytes=_VMEM_LIMIT_BYTES,
        ),
        input_output_aliases=io_alias,
    )(xr, wt, b_eff)
    return out.reshape(B, C, H, W)


# ---------------------------------------------------------------------------
# Pure-JAX reference mirroring the PyTorch forward literally (explicit padded
# Conv1d on the length-1 pooled sequence), used for verification.
def _conv1d_len1(p, w, b, pad):
    # p: (B, C, 1), w: (O, C, K), b: (O,)
    xp = jnp.pad(p, ((0, 0), (0, 0), (pad, pad)))            # (B, C, K)
    out = jnp.einsum('ock,bck->bo', w, xp)                   # (B, O)
    return out[..., None] + b[None, :, None]                 # (B, O, 1)


def pca_reference(x, w1, b1, w3, b3, w5, b5):
    u = x
    avg = jnp.mean(x, axis=(2, 3))[..., None]                    # (B, C, 1)
    mx = jnp.max(x, axis=(2, 3))[..., None]                      # (B, C, 1)
    outs_avg = (_conv1d_len1(avg, w1, b1, 0)
                + _conv1d_len1(avg, w3, b3, 1)
                + _conv1d_len1(avg, w5, b5, 2))
    outs_max = (_conv1d_len1(mx, w1, b1, 0)
                + _conv1d_len1(mx, w3, b3, 1)
                + _conv1d_len1(mx, w5, b5, 2))
    out = outs_avg + outs_max                                    # (B, C, 1)
    return u * out[..., None]                                    # (B, C, H, W)


if __name__ == "__main__":
    key = jax.random.PRNGKey(0)
    kx, kx2, k1w, k1b, k3w, k3b, k5w, k5b = jax.random.split(key, 8)

    B, C = 2, 4

    # Deterministic synthetic Conv1d parameters (shapes match nn.Conv1d(C, C, k)).
    def init_w(k, shape, fan_in):
        bound = 1.0 / (fan_in ** 0.5)
        return jax.random.uniform(k, shape, jnp.float32, -bound, bound)

    w1 = init_w(k1w, (C, C, 1), C * 1); b1 = init_w(k1b, (C,), C * 1)
    w3 = init_w(k3w, (C, C, 3), C * 3); b3 = init_w(k3b, (C,), C * 3)
    w5 = init_w(k5w, (C, C, 5), C * 5); b5 = init_w(k5b, (C,), C * 5)

    # 1) fused batch-pipelined path (auto-selected at this size): grid=(B,)
    x = jax.random.normal(kx, (B, C, 16, 16), dtype=jnp.float32)
    y = pca_forward(x, w1, b1, w3, b3, w5, b5)
    jax.block_until_ready(y)
    y_ref = pca_reference(x, w1, b1, w3, b3, w5, b5)
    assert y.shape == x.shape
    assert jnp.allclose(y, y_ref, rtol=1e-5, atol=1e-5), "fused path mismatch"

    # 2) two-phase HW-tiled path (forced): HW=256 -> two lane-dense 128-wide tiles
    y_tp = pca_forward(x, w1, b1, w3, b3, w5, b5,
                       force_two_phase=True, hw_tile=128)
    jax.block_until_ready(y_tp)
    assert jnp.allclose(y_tp, y_ref, rtol=1e-5, atol=1e-5), "two-phase path mismatch"

    # 3) two-phase with HW not a multiple of the tile (17*17=289): exercises the
    #    padded-lane masking of the sum / max reductions.
    x2 = jax.random.normal(kx2, (B, C, 17, 17), dtype=jnp.float32)
    y2 = pca_forward(x2, w1, b1, w3, b3, w5, b5,
                     force_two_phase=True, hw_tile=128)
    jax.block_until_ready(y2)
    y2_ref = pca_reference(x2, w1, b1, w3, b3, w5, b5)
    assert jnp.allclose(y2, y2_ref, rtol=1e-5, atol=1e-5), "masked-tail mismatch"

    print("KERNEL_OK")
</pallas_src>

<mosaic_0001>
module attributes {stable_mosaic.version = 11 : i64} {
  func.func @_pca_fused_kernel(%arg0: i32, %arg1: memref<1x4x256xf32, #tpu.memory_space<vmem>>, %arg2: memref<4x4xf32, #tpu.memory_space<vmem>>, %arg3: memref<1x4xf32, #tpu.memory_space<vmem>>, %arg4: memref<1x4x256xf32, #tpu.memory_space<vmem>>) attributes {dimension_semantics = [#tpu.dimension_semantics<parallel>], iteration_bounds = array<i64: 2>, scalar_prefetch = 0 : i64, scratch_operands = 0 : i64, tpu.core_type = #tpu.core_type<tc>, window_params = [{transform_indices = @transform_0, window_bounds = array<i64: 1, 4, 256>}, {pipeline_mode = #tpu.pipeline_mode<synchronous>, transform_indices = @transform_1, window_bounds = array<i64: 4, 4>}, {pipeline_mode = #tpu.pipeline_mode<synchronous>, transform_indices = @transform_2, window_bounds = array<i64: 1, 4>}, {transform_indices = @transform_3, window_bounds = array<i64: 1, 4, 256>}]} {
    %c0 = arith.constant 0 : index
    %c0_0 = arith.constant 0 : index
    %c0_1 = arith.constant 0 : index
    %0 = vector.load %arg1[%c0, %c0_0, %c0_1] : memref<1x4x256xf32, #tpu.memory_space<vmem>>, vector<1x4x256xf32>
    %cst = arith.constant dense<0.000000e+00> : vector<1x4xf32>
    %1 = vector.multi_reduction <add>, %0, %cst [2] : vector<1x4x256xf32> to vector<1x4xf32>
    %cst_2 = arith.constant 3.906250e-03 : f32
    %2 = vector.broadcast %cst_2 : f32 to vector<1x4xf32>
    %3 = arith.mulf %1, %2 : vector<1x4xf32>
    %cst_3 = arith.constant dense<0xFF800000> : vector<1x4xf32>
    %4 = vector.multi_reduction <maximumf>, %0, %cst_3 [2] : vector<1x4x256xf32> to vector<1x4xf32>
    %5 = arith.addf %3, %4 : vector<1x4xf32>
    %c0_4 = arith.constant 0 : index
    %c0_5 = arith.constant 0 : index
    %6 = vector.load %arg2[%c0_4, %c0_5] : memref<4x4xf32, #tpu.memory_space<vmem>>, vector<4x4xf32>
    %cst_6 = arith.constant dense<0.000000e+00> : vector<1x4xf32>
    %7 = tpu.matmul %5, %6, %cst_6 {dimension_numbers = #tpu.dot_dimension_numbers<[1], [0], [0], [1], [0, 0, 1, 1], [], []>} : vector<1x4xf32>, vector<4x4xf32>, vector<1x4xf32> -> vector<1x4xf32>
    %c0_7 = arith.constant 0 : index
    %c0_8 = arith.constant 0 : index
    %8 = vector.load %arg3[%c0_7, %c0_8] : memref<1x4xf32, #tpu.memory_space<vmem>>, vector<1x4xf32>
    %9 = arith.addf %7, %8 : vector<1x4xf32>
    %10 = vector.shape_cast %9 : vector<1x4xf32> to vector<1x4x1xf32>
    %11 = vector.broadcast %10 : vector<1x4x1xf32> to vector<1x4x256xf32>
    %12 = arith.mulf %0, %11 : vector<1x4x256xf32>
    %c0_9 = arith.constant 0 : index
    %c0_10 = arith.constant 0 : index
    %c0_11 = arith.constant 0 : index
    %13 = vector.load %arg4[%c0_9, %c0_10, %c0_11] : memref<1x4x256xf32, #tpu.memory_space<vmem>>, vector<1x4x256xf32>
    tpu.vector_store %arg4[%c0_9, %c0_10, %c0_11], %12 {strides = array<i32>} : memref<1x4x256xf32, #tpu.memory_space<vmem>>, vector<1x4x256xf32>,
    return
  }
  func.func @transform_0(%arg0: i32) -> (i32, i32, i32) {
    %c0_i32 = arith.constant 0 : i32
    %c0_i32_0 = arith.constant 0 : i32
    %c0_i32_1 = arith.constant 0 : i32
    return %arg0, %c0_i32, %c0_i32_0 : i32, i32, i32
  }
  func.func @transform_1(%arg0: i32) -> (i32, i32) {
    %c0_i32 = arith.constant 0 : i32
    %c0_i32_0 = arith.constant 0 : i32
    %c0_i32_1 = arith.constant 0 : i32
    return %c0_i32, %c0_i32_0 : i32, i32
  }
  func.func @transform_2(%arg0: i32) -> (i32, i32) {
    %c0_i32 = arith.constant 0 : i32
    %c0_i32_0 = arith.constant 0 : i32
    %c0_i32_1 = arith.constant 0 : i32
    return %c0_i32, %c0_i32_0 : i32, i32
  }
  func.func @transform_3(%arg0: i32) -> (i32, i32, i32) {
    %c0_i32 = arith.constant 0 : i32
    %c0_i32_0 = arith.constant 0 : i32
    %c0_i32_1 = arith.constant 0 : i32
    return %arg0, %c0_i32, %c0_i32_0 : i32, i32, i32
  }
}

</mosaic_0001>

<llo_original>
// kernel: tpu_custom_call.1
$region0: #{tpu_custom_call.1}
  #allocation0 [shape = 'u32[]', space=smem, size = 0x4, offset = 0x4, fixed_abs, tag = 'smem constant byte address 0x4 - core index']
  #allocation1 [shape = 'u32[144,128]{1,0:T(1,128)}', space=vmem, size = 0x12000, scoped, tag = 'internal scratch']
  %s0 = inlined_call_operand.hbm [shape: f32[2,4,256], index: 0, kind: input, shape index: {}]
  %s1 = inlined_call_operand.hbm [shape: f32[4,4], index: 1, kind: input, shape index: {}]
  %s2 = inlined_call_operand.vmem [shape: f32[1,4], index: 2, kind: input, shape index: {}]
  %s3 = inlined_call_operand.hbm [shape: f32[2,4,256], index: 3, kind: output, shape index: {}]
  %s4 = sld [smem:[#allocation0]]
  $region53: #{tpu_custom_call.1} parent=0
    _
  %s6 = ssub.s32 1, %s4
  %s7 = scalar_select 0, %s6, %s4
  $region1: #{tpu_custom_call.1} parent=0
    #allocation2 [shape = 'u8[8192]{0}', space=vmem, size = 0x2000, scoped, tag = 'input window, operand 0']
    #allocation3 [shape = 's32[2]{0}', space=sflag, size = 0x8, scoped, tag = 'scoped memory for tpu_custom_call.1']
    #allocation4 [shape = 's32[2]{0}', space=sflag, size = 0x8, scoped, tag = 'scoped memory for tpu_custom_call.1']
    #allocation5 [shape = 'u8[2048]{0}', space=vmem, size = 0x800, scoped, tag = 'input window, operand 1, single buffered']
    #allocation6 [shape = 's32[1]{0}', space=sflag, size = 0x4, scoped, tag = 'scoped memory for tpu_custom_call.1']
    #allocation7 [shape = 'u8[8192]{0}', space=vmem, size = 0x2000, scoped, tag = 'output window, operand 0']
    %8 = vsyncpa [#allocation3], 0
    %s9 = scalar_lea.sflag [#allocation3], 1
    %10 = vsyncpa %s9, 0
    %11 = vsyncpa [#allocation6], 0
    %12 = vsyncpa [#allocation4], 0
    %s13 = scalar_lea.sflag [#allocation4], 1
    %14 = vsyncpa %s13, 0
    loop: start=0, step=1, limit=4
    $region2: #{tpu_custom_call.1} parent=1 // loop_pre_header
      _
    $region3: #{tpu_custom_call.1} parent=1 // loop_header
      %s16 = sphi 0, %s20
      %p17 = scmp.ge.s32.totalorder %s16, 4
      %s26 = sphi 0, %s28
      %s29 = sphi 0, %s26
      %s30 = sphi 0, %s29
      %s46 = sphi 0, %s30
      %s50 = sphi 0, %s50
      %s52 = sphi 0, %s50
      %s53 = sphi 0, %s52
      %s67 = sphi 0, %s53
      %s71 = sphi 0, %s71
      %s73 = sphi 0, %s71
      %s74 = sphi 0, %s73
      %s88 = sphi 0, %s74
      %s94 = sphi 0, %s96
      %s97 = sphi 0, %s94
      %s98 = sphi 0, %s97
      %s114 = sphi 0, %s98
    $region4: #{tpu_custom_call.1} parent=1 // loop_header_branch
      %19 = sbr.rel (%p17) target = $region8
    $region5: #{tpu_custom_call.1} parent=1 // loop_body
      %s21 = ssub.s32 %s16, 1
      %s22 = ssub.s32 %s16, 2
      %s23 = sadd.s32 %s16, 1
      %s24 = ssub.s32 %s16, %s23
      %p25 = scmp.eq.s32.totalorder %s24, 0
      %s27 = sadd.s32 %s26, 1
      %s28 = scalar_select %p25, %s26, %s27
      %p31 = pneg %p25
      %p32 = scmp.eq.s32.totalorder %s16, 1
      %p33 = por %p31, %p32
      %p34 = scmp.ne.s32.totalorder %s26, %s29
      %p35 = scmp.eq.s32.totalorder %s16, 0
      %p36 = por %p34, %p35
      %p37 = scmp.ne.s32.totalorder %s26, %s29
      %p38 = scmp.eq.s32.totalorder %s21, 1
      %p39 = por %p37, %p38
      %p40 = scmp.ne.s32.totalorder %s29, %s30
      %p41 = scmp.eq.s32.totalorder %s21, 0
      %p42 = por %p40, %p41
      %p43 = scmp.ne.s32.totalorder %s29, %s30
      %p44 = scmp.eq.s32.totalorder %s22, 1
      %p45 = por %p43, %p44
      %p47 = scmp.ne.s32.totalorder %s30, %s46
      %p48 = scmp.eq.s32.totalorder %s22, 0
      %p49 = por %p47, %p48
      %s51 = sadd.s32 %s50, 1
      %p54 = scmp.eq.s32.totalorder %s16, 1
      %p55 = scmp.ne.s32.totalorder %s50, %s52
      %p56 = scmp.eq.s32.totalorder %s16, 0
      %p57 = por %p55, %p56
      %p58 = scmp.ne.s32.totalorder %s50, %s52
      %p59 = scmp.eq.s32.totalorder %s21, 1
      %p60 = por %p58, %p59
      %p61 = scmp.ne.s32.totalorder %s52, %s53
      %p62 = scmp.eq.s32.totalorder %s21, 0
      %p63 = por %p61, %p62
      %p64 = scmp.ne.s32.totalorder %s52, %s53
      %p65 = scmp.eq.s32.totalorder %s22, 1
      %p66 = por %p64, %p65
      %p68 = scmp.ne.s32.totalorder %s53, %s67
      %p69 = scmp.eq.s32.totalorder %s22, 0
      %p70 = por %p68, %p69
      %s72 = sadd.s32 %s71, 1
      %p75 = scmp.eq.s32.totalorder %s16, 1
      %p76 = scmp.ne.s32.totalorder %s71, %s73
      %p77 = scmp.eq.s32.totalorder %s16, 0
      %p78 = por %p76, %p77
      %p79 = scmp.ne.s32.totalorder %s71, %s73
      %p80 = scmp.eq.s32.totalorder %s21, 1
      %p81 = por %p79, %p80
      %p82 = scmp.ne.s32.totalorder %s73, %s74
      %p83 = scmp.eq.s32.totalorder %s21, 0
      %p84 = por %p82, %p83
      %p85 = scmp.ne.s32.totalorder %s73, %s74
      %p86 = scmp.eq.s32.totalorder %s22, 1
      %p87 = por %p85, %p86
      %p89 = scmp.ne.s32.totalorder %s74, %s88
      %p90 = scmp.eq.s32.totalorder %s22, 0
      %p91 = por %p89, %p90
      %s92 = ssub.s32 %s16, %s23
      %p93 = scmp.eq.s32.totalorder %s92, 0
      %s95 = sadd.s32 %s94, 1
      %s96 = scalar_select %p93, %s94, %s95
      %p99 = pneg %p93
      %p100 = scmp.eq.s32.totalorder %s16, 1
      %p101 = por %p99, %p100
      %p102 = scmp.ne.s32.totalorder %s94, %s97
      %p103 = scmp.eq.s32.totalorder %s16, 0
      %p104 = por %p102, %p103
      %p105 = scmp.ne.s32.totalorder %s94, %s97
      %p106 = scmp.eq.s32.totalorder %s21, 1
      %p107 = por %p105, %p106
      %p108 = scmp.ne.s32.totalorder %s97, %s98
      %p109 = scmp.eq.s32.totalorder %s21, 0
      %p110 = por %p108, %p109
      %p111 = scmp.ne.s32.totalorder %s97, %s98
      %p112 = scmp.eq.s32.totalorder %s22, 1
      %p113 = por %p111, %p112
      %p115 = scmp.ne.s32.totalorder %s98, %s114
      %p116 = scmp.eq.s32.totalorder %s22, 0
      %p117 = por %p115, %p116
      %p118 = scmp.le.s32.totalorder 1, %s16
      %p119 = scmp.lt.s32.totalorder %s16, 3
      %p120 = pnand %p118, %p119
      %p121 = pneg %p120
      // Predicated region
      $region9: #{tpu_custom_call.1} parent=5 // pred_check
        _
      $region10: #{tpu_custom_call.1} parent=5 // pred_check_branch
        %123 = sbr.rel (%p120) target = $region12
      $region11: #{tpu_custom_call.1} parent=5 // pred_region
        %s124 = ssub.s32 %s16, 1
        // Predicated region
        $region13: #{tpu_custom_call.1} parent=11 // pred_check
          %p125 = pneg %p63
        $region14: #{tpu_custom_call.1} parent=11 // pred_check_branch
          %127 = sbr.rel (%p125) target = $region16
        $region15: #{tpu_custom_call.1} parent=11 // pred_region
          %s129 = ssub.s32 64, 64
          %130 = vsyncadd [#allocation6], %s129
          %s132 = sshll.u32 [#allocation5], 4
          %s133 = int_to_ptr.vmem [resolvable:$true] %s132
          %135 = dma.hbm_to_vmem [thread:$0]  %s1, 64, %s133, [#allocation6]
        $region16: #{tpu_custom_call.1} parent=11 // pred_fallthru
          _
        // Predicated region
        $region17: #{tpu_custom_call.1} parent=11 // pred_check
          %p136 = pneg %p84
        $region18: #{tpu_custom_call.1} parent=11 // pred_check_branch
          %138 = sbr.rel (%p136) target = $region20
        $region19: #{tpu_custom_call.1} parent=11 // pred_region
          _
        $region20: #{tpu_custom_call.1} parent=11 // pred_fallthru
          _
      $region12: #{tpu_custom_call.1} parent=5 // pred_fallthru
        _
      %p139 = scmp.lt.s32.totalorder %s16, 2
      // Predicated region
      $region21: #{tpu_custom_call.1} parent=5 // pred_check
        %p140 = pneg %p139
      $region22: #{tpu_custom_call.1} parent=5 // pred_check_branch
        %142 = sbr.rel (%p140) target = $region24
      $region23: #{tpu_custom_call.1} parent=5 // pred_region
        // Predicated region
        $region25: #{tpu_custom_call.1} parent=23 // pred_check
          %p143 = pneg %p36
        $region26: #{tpu_custom_call.1} parent=23 // pred_check_branch
          %145 = sbr.rel (%p143) target = $region28
        $region27: #{tpu_custom_call.1} parent=23 // pred_region
          %s146 = sand.u32 %s26, 1
          %s147 = scalar_lea.sflag [#allocation3], %s146
          %s148 = sand.u32 %s26, 1
          %s149 = smul.addr %s148, 8
          %s150 = scalar_lea.vmem [#allocation2], %s149
          %s152 = ssub.s32 128, 128
          %153 = vsyncadd %s147, %s152
          %s154 = smul.addr %s16, 2
          %s155 = smul.addr %s154, 64
          %s156 = scalar_lea.hbm %s0, %s155
          %s158 = sshll.u32 %s150, 4
          %s159 = int_to_ptr.vmem [resolvable:$true] %s158
          %161 = dma.hbm_to_vmem [thread:$0]  %s156, 128, %s159, %s147
        $region28: #{tpu_custom_call.1} parent=23 // pred_fallthru
          _
      $region24: #{tpu_custom_call.1} parent=5 // pred_fallthru
        _
      %p162 = scmp.le.s32.totalorder 1, %s16
      %p163 = scmp.lt.s32.totalorder %s16, 3
      %p164 = pnand %p162, %p163
      %p165 = pneg %p164
      // Predicated region
      $region29: #{tpu_custom_call.1} parent=5 // pred_check
        _
      $region30: #{tpu_custom_call.1} parent=5 // pred_check_branch
        %167 = sbr.rel (%p164) target = $region32
      $region31: #{tpu_custom_call.1} parent=5 // pred_region
        %s168 = ssub.s32 %s16, 1
        %s169 = sand.u32 %s29, 1
        %s170 = scalar_lea.sflag [#allocation3], %s169
        %s171 = sand.u32 %s29, 1
        %s172 = smul.addr %s171, 8
        %s173 = scalar_lea.vmem [#allocation2], %s172
        // Predicated region
        $region33: #{tpu_custom_call.1} parent=31 // pred_check
          %p174 = pneg %p42
        $region34: #{tpu_custom_call.1} parent=31 // pred_check_branch
          %176 = sbr.rel (%p174) target = $region36
        $region35: #{tpu_custom_call.1} parent=31 // pred_region
          %177 = dma.done %s170, 128
        $region36: #{tpu_custom_call.1} parent=31 // pred_fallthru
          _
        // Predicated region
        $region37: #{tpu_custom_call.1} parent=31 // pred_check
          %p178 = pneg %p63
        $region38: #{tpu_custom_call.1} parent=31 // pred_check_branch
          %180 = sbr.rel (%p178) target = $region40
        $region39: #{tpu_custom_call.1} parent=31 // pred_region
          %181 = dma.done [#allocation6], 64
        $region40: #{tpu_custom_call.1} parent=31 // pred_fallthru
          _
        %s182 = sand.u32 %s29, 1
        %s183 = scalar_lea.sflag [#allocation3], %s182
        %s184 = sand.u32 %s29, 1
        %s185 = smul.addr %s184, 8
        %s186 = scalar_lea.vmem [#allocation2], %s185
        %p187 = pneg %p42
        %p188 = pneg %p39
        %p189 = pneg %p63
        %p190 = pneg %p60
        %p191 = pneg %p84
        %p192 = pneg %p81
        %p193 = pneg %p110
        %p194 = pneg %p107
        %s195 = sand.u32 %s97, 1
        %s196 = scalar_lea.sflag [#allocation4], %s195
        %s197 = sand.u32 %s97, 1
        %s198 = smul.addr %s197, 8
        %s199 = scalar_lea.vmem [#allocation7], %s198
        %v200 = vld [vmem:[%s173] sm:$0xff]
        %v202 = vcombine.high %v200, %v200
        %vm204 = vcmask 1043456
        %v205 = vsel %vm204, %v200, 0.0
        %v206 = vsel %vm204, %v202, 0.0
        %v207 = vadd.f32 %v205, %v206
        %208 = vadd.xlane.f32.xlu0 %v207
        %v209 = vpop.xlane.xlu0 %208
        %v210 = vmul.f32 %v209, 0.00390625
        %v211 = vsel %vm204, %v200, -inf
        %v212 = vsel %vm204, %v202, -inf
        %v213 = vmax.f32 %v211, %v212
        %214 = vmax.xlane.f32.xlu0 %v213
        %v215 = vpop.xlane.xlu0 %214
        %v216 = vadd.f32 %v210, %v215
        %v217 = vld [vmem:[#allocation5] sm:$0xf]
        %v218 = vld [vmem:[%s2] sm:$0x1]
        %v220 = vlaneseq
        %v221 = vand.u32 %v220, 127
        %v222 = vlaneseq
        %v223 = vshrl.u32 %v222, 7
        %v224 = vsub.s32 %v221, %v223
        %v225 = vrot.slane %v216, %v224
        %vm226 = vcmask 31744
        %v227 = vsel %vm226, %v225, 0
        %v230 = vsel %vm204, %v217, 0
        %232 = vmatprep.subr.mxu0 0.0
        %233 = vmatpush1.msra.mxu0 0.0
        %234 = vmatprep.subr.mxu0 0.0
        %235 = vmatpush1.msra.mxu0 0.0
        %236 = vmatprep.subr.mxu0 0.0
        %237 = vmatpush1.msra.mxu0 0.0
        %238 = vmatprep.subr.mxu0 0.0
        %239 = vmatpush1.msra.mxu0 0.0
        %240 = vmatprep.subr.mxu0 0.0
        %241 = vmatpush1.msra.mxu0 0.0
        %242 = vmatprep.subr.mxu0 0.0
        %243 = vmatpush1.msra.mxu0 0.0
        %244 = vmatprep.subr.mxu0 0.0
        %245 = vmatpush1.msra.mxu0 0.0
        %246 = vmatprep.subr.mxu0 0.0
        %247 = vmatpush1.msra.mxu0 0.0
        %248 = vmatprep.subr.mxu0 0.0
        %249 = vmatpush1.msra.mxu0 0.0
        %250 = vmatprep.subr.mxu0 0.0
        %251 = vmatpush1.msra.mxu0 0.0
        %252 = vmatprep.subr.mxu0 0.0
        %253 = vmatpush1.msra.mxu0 0.0
        %254 = vmatprep.subr.mxu0 0.0
        %255 = vmatpush1.msra.mxu0 0.0
        %256 = vmatprep.subr.mxu0 0.0
        %257 = vmatpush1.msra.mxu0 0.0
        %258 = vmatprep.subr.mxu0 0.0
        %259 = vmatpush1.msra.mxu0 0.0
        %260 = vmatprep.subr.mxu0 0.0
        %261 = vmatpush1.msra.mxu0 0.0
        %262 = vmatprep.subr.mxu0 0.0
        %263 = vmatpush1.msra.mxu0 %v230
        %264 = vmatprep.subr.mxu0 0.0
        %265 = vmatpush2.msra.mxu0 0.0
        %266 = vmatprep.subr.mxu0 0.0
        %267 = vmatpush2.msra.mxu0 0.0
        %268 = vmatprep.subr.mxu0 0.0
        %269 = vmatpush2.msra.mxu0 0.0
        %270 = vmatprep.subr.mxu0 0.0
        %271 = vmatpush2.msra.mxu0 0.0
        %272 = vmatprep.subr.mxu0 0.0
        %273 = vmatpush2.msra.mxu0 0.0
        %274 = vmatprep.subr.mxu0 0.0
        %275 = vmatpush2.msra.mxu0 0.0
        %276 = vmatprep.subr.mxu0 0.0
        %277 = vmatpush2.msra.mxu0 0.0
        %278 = vmatprep.subr.mxu0 0.0
        %279 = vmatpush2.msra.mxu0 0.0
        %280 = vmatprep.subr.mxu0 0.0
        %281 = vmatpush2.msra.mxu0 0.0
        %282 = vmatprep.subr.mxu0 0.0
        %283 = vmatpush2.msra.mxu0 0.0
        %284 = vmatprep.subr.mxu0 0.0
        %285 = vmatpush2.msra.mxu0 0.0
        %286 = vmatprep.subr.mxu0 0.0
        %287 = vmatpush2.msra.mxu0 0.0
        %288 = vmatprep.subr.mxu0 0.0
        %289 = vmatpush2.msra.mxu0 0.0
        %290 = vmatprep.subr.mxu0 0.0
        %291 = vmatpush2.msra.mxu0 0.0
        %292 = vmatprep.subr.mxu0 0.0
        %293 = vmatpush2.msra.mxu0 0.0
        %294 = vmatprep.subr.mxu0 0.0
        %295 = vmatpush2.msra.mxu0 0.0
        %296 = vmatprep.mubr.f32.mxu0 0.0
        %297 = vmatmul.mubr.f32.gmra.mxu0 %v227
        %v298 = vpop.f32.mrf.mxu0
        %v299 = vadd.f32 %v218, %v298
        %v300 = vpop.f32.mrf.mxu0
        %301 = vdwg.mxu0
        %v302 = vlaneseq
        %v303 = vshrl.u32 %v302, 7
        %v304 = vsub.s32 0, %v303
        %v305 = vrot.slane %v299, %v304
        %307 = vbcast.lane.b32.xlu0 %v305, 256
        %v308 = vpop.permute.xlu0 %307
        %v311 = vunpack.c.l.s4 839922192
        %v312 = vunpack.c.0.s8 %v311
        %v313 = vlaneseq
        %v314 = vshrl.u32 %v313, 7
        %v315 = vsub.s32 %v312, %v314
        %v316 = vrot.slane %v308, %v315
        %v318 = vmul.f32 %v200, %v316
        %319 = vst [vmem:[%s199] sm:$0xff] %v318
        %s320 = sand.u32 %s97, 1
        %s321 = scalar_lea.sflag [#allocation4], %s320
        %s322 = sand.u32 %s97, 1
        %s323 = smul.addr %s322, 8
        %s324 = scalar_lea.vmem [#allocation7], %s323
        // Predicated region
        $region41: #{tpu_custom_call.1} parent=31 // pred_check
          %p325 = pneg %p107
        $region42: #{tpu_custom_call.1} parent=31 // pred_check_branch
          %327 = sbr.rel (%p325) target = $region44
        $region43: #{tpu_custom_call.1} parent=31 // pred_region
          %s329 = ssub.s32 128, 128
          %330 = vsyncadd %s321, %s329
          %s331 = smul.addr %s21, 2
          %s332 = smul.addr %s331, 64
          %s333 = scalar_lea.hbm %s3, %s332
          %s335 = sshll.u32 %s324, 4
          %s336 = int_to_ptr.vmem [resolvable:$true] %s335
          %338 = dma.vmem_to_hbm [thread:$0]  %s336, 128, %s333, %s321
        $region44: #{tpu_custom_call.1} parent=31 // pred_fallthru
          _
      $region32: #{tpu_custom_call.1} parent=5 // pred_fallthru
        _
      %p339 = scmp.le.s32.totalorder 2, %s16
      // Predicated region
      $region45: #{tpu_custom_call.1} parent=5 // pred_check
        %p340 = pneg %p339
      $region46: #{tpu_custom_call.1} parent=5 // pred_check_branch
        %342 = sbr.rel (%p340) target = $region48
      $region47: #{tpu_custom_call.1} parent=5 // pred_region
        %s343 = ssub.s32 %s16, 2
        // Predicated region
        $region49: #{tpu_custom_call.1} parent=47 // pred_check
          %p344 = pneg %p113
        $region50: #{tpu_custom_call.1} parent=47 // pred_check_branch
          %346 = sbr.rel (%p344) target = $region52
        $region51: #{tpu_custom_call.1} parent=47 // pred_region
          %s347 = sand.u32 %s98, 1
          %s348 = scalar_lea.sflag [#allocation4], %s347
          %s349 = sand.u32 %s98, 1
          %s350 = smul.addr %s349, 8
          %s351 = scalar_lea.vmem [#allocation7], %s350
          %352 = dma.done %s348, 128
        $region52: #{tpu_custom_call.1} parent=47 // pred_fallthru
          _
      $region48: #{tpu_custom_call.1} parent=5 // pred_fallthru
        _
    $region6: #{tpu_custom_call.1} parent=1 // loop_footer
      %s20 = sadd.s32 1, %s16
    $region7: #{tpu_custom_call.1} parent=1 // loop_footer_branch
      %15 = sbr.rel target = $region3
    $region8: #{tpu_custom_call.1} parent=1 // loop_exit
      _
    %353 = vsyncpa [#allocation3], 1
    %s354 = scalar_lea.sflag [#allocation3], 1
    %355 = vsyncpa %s354, 1
    %356 = vsyncpa [#allocation6], 1
    %357 = vsyncpa [#allocation4], 1
    %s358 = scalar_lea.sflag [#allocation4], 1
    %359 = vsyncpa %s358, 1

</llo_original>
